<compile_context>
chip_gen: v5e
topology: v5e:2x2
jax: 0.10.0
libtpu: 0.0.40
codegen_flags: <defaults>
</compile_context>

<pallas_src>
import jax
import jax.numpy as jnp
from jax.experimental import pallas as pl
from jax.experimental.pallas import tpu as pltpu


def _round_up(x, m):
    return ((x + m - 1) // m) * m


def _mlp_kernel(x_ref, w1_ref, b1_ref, w2_ref, o_ref):
    # Layer 1 on the MXU in the weight dtype (bf16-ready), f32 accumulation.
    h = jnp.dot(x_ref[...].astype(w1_ref.dtype), w1_ref[...],
                preferred_element_type=jnp.float32)
    # Bias add + ReLU in f32 (v5e VPU has no bf16 ALU).  b1_ref[0, M] == 1.0
    # forces h[:, M] == 1 so the b2 row stored in w2_aug gets applied below.
    h = jnp.maximum(h + b1_ref[...], 0.0)
    # Layer 2 (+ b2 via the always-one hidden column), f32 accumulation.
    o = jnp.dot(h.astype(w2_ref.dtype), w2_ref[...],
                preferred_element_type=jnp.float32)
    # Store only the real (narrow) class columns: ~16x less HBM writeback than
    # the previous 128-lane padded store (vst count unchanged, bytes way down).
    o_ref[...] = o[:, :o_ref.shape[1]].astype(o_ref.dtype)


def prepare_params(w1, b1, w2, b2, *, lane=128):
    """One-time packing of the two Linear layers' params (outside the hot path).

    w1: (F, M), b1: (M,), w2: (M, C), b2: (C,)
    Returns:
      w1_p:   (F, Hp)   w1 zero-padded to Hp = round128(M + 1) hidden columns.
      b1_row: (1, Hp)   f32 row: b1 in [:M], 1.0 at column M (the always-one
                        hidden unit that feeds the layer-2 bias), zeros after.
      w2_aug: (Hp, Cp)  rows [w2; b2], zero-padded to lane-dense Cp = round128(C).
    """
    F, M = w1.shape
    C = w2.shape[1]
    Hp = _round_up(M + 1, lane)
    Cp = _round_up(C, lane)
    dt = w1.dtype

    w1_p = jnp.zeros((F, Hp), dt).at[:, :M].set(w1)

    b1_row = jnp.zeros((1, Hp), jnp.float32)
    b1_row = b1_row.at[0, :M].set(b1.astype(jnp.float32))
    b1_row = b1_row.at[0, M].set(1.0)   # ones hidden unit; ReLU(1) = 1

    w2_aug = jnp.zeros((Hp, Cp), dt)
    w2_aug = w2_aug.at[:M, :C].set(w2)
    w2_aug = w2_aug.at[M, :C].set(b2)
    return w1_p, b1_row, w2_aug


def logistic_regression_forward(x, w1_p, b1_row, w2_aug, n_classes, *, tb=1024):
    """x: (B, F); w1_p: (F, Hp); b1_row: (1, Hp); w2_aug: (Hp, Cp) -> (B, n_classes)."""
    B, F = x.shape
    Fw, Hp = w1_p.shape
    Cp = w2_aug.shape[1]
    assert Fw == F, "w1_p must be the (F, Hp) zero-padded weight matrix"

    Co = _round_up(n_classes, 8)   # narrow lane width actually written to HBM

    # Batch tiling: cap at tb, but keep >= 2 grid steps once B >= 16 so the
    # ("parallel",) batch axis can be split across v7x's two TensorCores.
    TB = max(8, min(tb, _round_up(max(-(-B // 2), 1), 8)))
    Bp = _round_up(B, TB)
    if Bp != B:
        # Only ragged batches pay a pad copy; aligned batches stream x directly.
        x = jnp.pad(x, ((0, Bp - B), (0, 0)))

    isz = x.dtype.itemsize
    wsz = w1_p.dtype.itemsize
    flops = 2 * Bp * F * Hp + 2 * Bp * Hp * Cp
    bytes_accessed = (isz * (Bp * F + Bp * Co)        # x in, out (narrow) written
                      + wsz * (F * Hp + Hp * Cp)      # resident weights (once)
                      + 4 * Hp)                       # bias row (once)

    out = pl.pallas_call(
        _mlp_kernel,
        out_shape=jax.ShapeDtypeStruct((Bp, Co), x.dtype),
        grid_spec=pltpu.PrefetchScalarGridSpec(
            num_scalar_prefetch=0,
            grid=(Bp // TB,),
            in_specs=[
                pl.BlockSpec((TB, F), lambda i: (i, 0)),    # x tile (pipelined)
                pl.BlockSpec((F, Hp), lambda i: (0, 0)),    # resident weights
                pl.BlockSpec((1, Hp), lambda i: (0, 0)),    # resident bias row
                pl.BlockSpec((Hp, Cp), lambda i: (0, 0)),   # resident weights
            ],
            out_specs=pl.BlockSpec((TB, Co), lambda i: (i, 0)),
        ),
        compiler_params=pltpu.CompilerParams(
            dimension_semantics=("parallel",),   # megacore / v7x 2-TC batch split
        ),
        cost_estimate=pl.CostEstimate(
            flops=flops, transcendentals=0, bytes_accessed=bytes_accessed),
    )(x, w1_p, b1_row, w2_aug)

    return out[:B, :n_classes]


def _reference(x, w1, b1, w2, b2):
    h = jnp.maximum(x @ w1 + b1, 0.0)
    return h @ w2 + b2


if __name__ == "__main__":
    # Shapes implied by the module: n_features=32 -> medium=16 -> n_classes=4.
    batch = 8
    n_features = 32
    medium = n_features // 2
    n_classes = 4

    key = jax.random.PRNGKey(0)
    kx, kw1, kb1, kw2, kb2 = jax.random.split(key, 5)

    x = jax.random.normal(kx, (batch, n_features), dtype=jnp.float32)
    lim1 = 1.0 / (n_features ** 0.5)
    lim2 = 1.0 / (medium ** 0.5)
    w1 = jax.random.uniform(kw1, (n_features, medium), jnp.float32, -lim1, lim1)
    b1 = jax.random.uniform(kb1, (medium,), jnp.float32, -lim1, lim1)
    w2 = jax.random.uniform(kw2, (medium, n_classes), jnp.float32, -lim2, lim2)
    b2 = jax.random.uniform(kb2, (n_classes,), jnp.float32, -lim2, lim2)

    # One-time parameter packing (bias fold + lane-dense padding).
    w1_p, b1_row, w2_aug = prepare_params(w1, b1, w2, b2)

    fwd = jax.jit(
        lambda xx: logistic_regression_forward(xx, w1_p, b1_row, w2_aug, n_classes))

    out = jax.block_until_ready(fwd(x))
    ref = _reference(x, w1, b1, w2, b2)
    assert out.shape == (batch, n_classes)
    assert jnp.allclose(out, ref, atol=1e-5, rtol=1e-5)

    # Also exercise the multi-step (grid >= 2) and ragged-batch padding path.
    x_big = jax.random.normal(kx, (100, n_features), dtype=jnp.float32)
    out_big = jax.block_until_ready(fwd(x_big))
    ref_big = _reference(x_big, w1, b1, w2, b2)
    assert out_big.shape == (100, n_classes)
    assert jnp.allclose(out_big, ref_big, atol=1e-5, rtol=1e-5)

    print("KERNEL_OK")
</pallas_src>

<mosaic_0001>
module attributes {stable_mosaic.version = 11 : i64} {
  func.func @_mlp_kernel(%arg0: i32, %arg1: memref<8x32xf32, #tpu.memory_space<vmem>>, %arg2: memref<32x128xf32, #tpu.memory_space<vmem>>, %arg3: memref<1x128xf32, #tpu.memory_space<vmem>>, %arg4: memref<128x128xf32, #tpu.memory_space<vmem>>, %arg5: memref<8x8xf32, #tpu.memory_space<vmem>>) attributes {dimension_semantics = [#tpu.dimension_semantics<parallel>], iteration_bounds = array<i64: 1>, scalar_prefetch = 0 : i64, scratch_operands = 0 : i64, tpu.core_type = #tpu.core_type<tc>, window_params = [{transform_indices = @transform_0, window_bounds = array<i64: 8, 32>}, {pipeline_mode = #tpu.pipeline_mode<synchronous>, transform_indices = @transform_1, window_bounds = array<i64: 32, 128>}, {pipeline_mode = #tpu.pipeline_mode<synchronous>, transform_indices = @transform_2, window_bounds = array<i64: 1, 128>}, {pipeline_mode = #tpu.pipeline_mode<synchronous>, transform_indices = @transform_3, window_bounds = array<i64: 128, 128>}, {transform_indices = @transform_4, window_bounds = array<i64: 8, 8>}]} {
    %c0 = arith.constant 0 : index
    %c0_0 = arith.constant 0 : index
    %0 = vector.load %arg1[%c0, %c0_0] : memref<8x32xf32, #tpu.memory_space<vmem>>, vector<8x32xf32>
    %c0_1 = arith.constant 0 : index
    %c0_2 = arith.constant 0 : index
    %1 = vector.load %arg2[%c0_1, %c0_2] : memref<32x128xf32, #tpu.memory_space<vmem>>, vector<32x128xf32>
    %cst = arith.constant dense<0.000000e+00> : vector<8x128xf32>
    %2 = tpu.matmul %0, %1, %cst {dimension_numbers = #tpu.dot_dimension_numbers<[1], [0], [0], [1], [0, 0, 1, 1], [], []>} : vector<8x32xf32>, vector<32x128xf32>, vector<8x128xf32> -> vector<8x128xf32>
    %c0_3 = arith.constant 0 : index
    %c0_4 = arith.constant 0 : index
    %3 = vector.load %arg3[%c0_3, %c0_4] : memref<1x128xf32, #tpu.memory_space<vmem>>, vector<1x128xf32>
    %4 = vector.broadcast %3 : vector<1x128xf32> to vector<8x128xf32>
    %5 = arith.addf %2, %4 : vector<8x128xf32>
    %cst_5 = arith.constant 0.000000e+00 : f32
    %6 = vector.broadcast %cst_5 : f32 to vector<8x128xf32>
    %7 = arith.maximumf %5, %6 : vector<8x128xf32>
    %c0_6 = arith.constant 0 : index
    %c0_7 = arith.constant 0 : index
    %8 = vector.load %arg4[%c0_6, %c0_7] : memref<128x128xf32, #tpu.memory_space<vmem>>, vector<128x128xf32>
    %cst_8 = arith.constant dense<0.000000e+00> : vector<8x128xf32>
    %9 = tpu.matmul %7, %8, %cst_8 {dimension_numbers = #tpu.dot_dimension_numbers<[1], [0], [0], [1], [0, 0, 1, 1], [], []>} : vector<8x128xf32>, vector<128x128xf32>, vector<8x128xf32> -> vector<8x128xf32>
    %10 = vector.extract_strided_slice %9 {offsets = [0, 0], sizes = [8, 8], strides = [1, 1]} : vector<8x128xf32> to vector<8x8xf32>
    %c0_9 = arith.constant 0 : index
    %c0_10 = arith.constant 0 : index
    %11 = vector.load %arg5[%c0_9, %c0_10] : memref<8x8xf32, #tpu.memory_space<vmem>>, vector<8x8xf32>
    tpu.vector_store %arg5[%c0_9, %c0_10], %10 {strides = array<i32>} : memref<8x8xf32, #tpu.memory_space<vmem>>, vector<8x8xf32>,
    return
  }
  func.func @transform_0(%arg0: i32) -> (i32, i32) {
    %c0_i32 = arith.constant 0 : i32
    %c0_i32_0 = arith.constant 0 : i32
    return %arg0, %c0_i32 : i32, i32
  }
  func.func @transform_1(%arg0: i32) -> (i32, i32) {
    %c0_i32 = arith.constant 0 : i32
    %c0_i32_0 = arith.constant 0 : i32
    %c0_i32_1 = arith.constant 0 : i32
    return %c0_i32, %c0_i32_0 : i32, i32
  }
  func.func @transform_2(%arg0: i32) -> (i32, i32) {
    %c0_i32 = arith.constant 0 : i32
    %c0_i32_0 = arith.constant 0 : i32
    %c0_i32_1 = arith.constant 0 : i32
    return %c0_i32, %c0_i32_0 : i32, i32
  }
  func.func @transform_3(%arg0: i32) -> (i32, i32) {
    %c0_i32 = arith.constant 0 : i32
    %c0_i32_0 = arith.constant 0 : i32
    %c0_i32_1 = arith.constant 0 : i32
    return %c0_i32, %c0_i32_0 : i32, i32
  }
  func.func @transform_4(%arg0: i32) -> (i32, i32) {
    %c0_i32 = arith.constant 0 : i32
    %c0_i32_0 = arith.constant 0 : i32
    return %arg0, %c0_i32 : i32, i32
  }
}

</mosaic_0001>

<llo_original>
// kernel: _lambda_.1
$region0: #{_lambda_.1}
  #allocation0 [shape = 'u32[]', space=smem, size = 0x4, offset = 0x4, fixed_abs, tag = 'smem constant byte address 0x4 - core index']
  #allocation1 [shape = 'u32[72,128]{1,0:T(1,128)}', space=vmem, size = 0x9000, scoped, tag = 'internal scratch']
  %s0 = inlined_call_operand.hbm [shape: f32[8,32], index: 0, kind: input, shape index: {}]
  %s1 = inlined_call_operand.hbm [shape: f32[32,128], index: 1, kind: input, shape index: {}]
  %s2 = inlined_call_operand.vmem [shape: f32[1,128], index: 2, kind: input, shape index: {}]
  %s3 = inlined_call_operand.hbm [shape: f32[128,128], index: 3, kind: input, shape index: {}]
  %s4 = inlined_call_operand.vmem [shape: f32[8,8], index: 4, kind: output, shape index: {}]
  %s5 = sld [smem:[#allocation0]]
  $region38: #{_lambda_.1} parent=0
    _
  %s7 = ssub.s32 1, %s5
  %s8 = scalar_select 0, %s7, %s5
  $region1: #{_lambda_.1} parent=0
    #allocation2 [shape = 'u8[4096]{0}', space=vmem, size = 0x1000, scoped, tag = 'input window, operand 0, single buffered']
    #allocation3 [shape = 's32[1]{0}', space=sflag, size = 0x4, scoped, tag = 'scoped memory for _lambda_.1']
    #allocation4 [shape = 'u8[16384]{0}', space=vmem, size = 0x4000, scoped, tag = 'input window, operand 1, single buffered']
    #allocation5 [shape = 's32[1]{0}', space=sflag, size = 0x4, scoped, tag = 'scoped memory for _lambda_.1']
    #allocation6 [shape = 'u8[65536]{0}', space=vmem, size = 0x10000, scoped, tag = 'input window, operand 3, single buffered']
    %9 = vsyncpa [#allocation3], 0
    %10 = vsyncpa [#allocation5], 0
    // Predicated region
    $region2: #{_lambda_.1} parent=1 // pred_check
      _
    $region3: #{_lambda_.1} parent=1 // pred_check_branch
      %12 = sbr.rel (0) target = $region5
    $region4: #{_lambda_.1} parent=1 // pred_region
      %14 = vsyncadd [#allocation3], 0
      %s16 = sshll.u32 %s0, 4
      %s17 = int_to_ptr.hbm [resolvable:$true] %s16
      %s18 = sshll.u32 [#allocation2], 4
      %s19 = int_to_ptr.vmem [resolvable:$true] %s18
      %21 = dma.hbm_to_vmem [thread:$0]  %s17, 128, %s19, [#allocation3]
    $region5: #{_lambda_.1} parent=1 // pred_fallthru
      _
    // Predicated region
    $region6: #{_lambda_.1} parent=1 // pred_check
      _
    $region7: #{_lambda_.1} parent=1 // pred_check_branch
      %23 = sbr.rel (0) target = $region9
    $region8: #{_lambda_.1} parent=1 // pred_region
      %25 = vsyncadd [#allocation5], 0
      %s26 = sshll.u32 %s1, 4
      %s27 = int_to_ptr.hbm [resolvable:$true] %s26
      %s28 = sshll.u32 [#allocation4], 4
      %s29 = int_to_ptr.vmem [resolvable:$true] %s28
      %34 = dma.hbm_to_vmem [thread:$0]  %s27, 512, %s29, [#allocation5], 128, 128, 8
    $region9: #{_lambda_.1} parent=1 // pred_fallthru
      _
    // Predicated region
    $region10: #{_lambda_.1} parent=1 // pred_check
      _
    $region11: #{_lambda_.1} parent=1 // pred_check_branch
      %36 = sbr.rel (0) target = $region13
    $region12: #{_lambda_.1} parent=1 // pred_region
      _
    $region13: #{_lambda_.1} parent=1 // pred_fallthru
      _
    // Predicated region
    $region14: #{_lambda_.1} parent=1 // pred_check
      _
    $region15: #{_lambda_.1} parent=1 // pred_check_branch
      %38 = sbr.rel (0) target = $region17
    $region16: #{_lambda_.1} parent=1 // pred_region
      %40 = vsyncadd [#allocation5], 0
      %s41 = sshll.u32 %s3, 4
      %s42 = int_to_ptr.hbm [resolvable:$true] %s41
      %s43 = sshll.u32 [#allocation6], 4
      %s44 = int_to_ptr.vmem [resolvable:$true] %s43
      %49 = dma.hbm_to_vmem [thread:$0]  %s42, 2048, %s44, [#allocation5], 128, 128, 8
    $region17: #{_lambda_.1} parent=1 // pred_fallthru
      _
    // Predicated region
    $region18: #{_lambda_.1} parent=1 // pred_check
      _
    $region19: #{_lambda_.1} parent=1 // pred_check_branch
      %51 = sbr.rel (0) target = $region21
    $region20: #{_lambda_.1} parent=1 // pred_region
      %53 = dma.done [#allocation3], 128
    $region21: #{_lambda_.1} parent=1 // pred_fallthru
      _
    // Predicated region
    $region22: #{_lambda_.1} parent=1 // pred_check
      _
    $region23: #{_lambda_.1} parent=1 // pred_check_branch
      %55 = sbr.rel (0) target = $region25
    $region24: #{_lambda_.1} parent=1 // pred_region
      %57 = dma.done [#allocation5], 512
    $region25: #{_lambda_.1} parent=1 // pred_fallthru
      _
    // Predicated region
    $region26: #{_lambda_.1} parent=1 // pred_check
      _
    $region27: #{_lambda_.1} parent=1 // pred_check_branch
      %59 = sbr.rel (0) target = $region29
    $region28: #{_lambda_.1} parent=1 // pred_region
      %61 = dma.done [#allocation5], 2048
    $region29: #{_lambda_.1} parent=1 // pred_fallthru
      _
    %v62 = vld [vmem:[#allocation2] sm:$0xff]
    %v63 = vld [vmem:[#allocation4] sm:$0xff]
    %v64 = vld [vmem:[#allocation4 + $0x8] sm:$0xff]
    %v65 = vld [vmem:[#allocation4 + $0x10] sm:$0xff]
    %v66 = vld [vmem:[#allocation4 + $0x18] sm:$0xff]
    %v67 = vld [vmem:[%s2] sm:$0x1]
    %v69 = vperm.slane %v67, 0
    %vm71 = vcmask 261120
    %v73 = vsel %vm71, %v62, 0
    %75 = vmatpush.msra.mxu0 0.0
    %76 = vmatpush.msra.mxu0 0.0
    %77 = vmatpush.msra.mxu0 0.0
    %78 = vmatpush.msra.mxu0 0.0
    %79 = vmatpush.msra.mxu0 0.0
    %80 = vmatpush.msra.mxu0 0.0
    %81 = vmatpush.msra.mxu0 0.0
    %82 = vmatpush.msra.mxu0 0.0
    %83 = vmatpush.msra.mxu0 0.0
    %84 = vmatpush.msra.mxu0 0.0
    %85 = vmatpush.msra.mxu0 0.0
    %86 = vmatpush.msra.mxu0 0.0
    %87 = vmatpush.msra.mxu0 %v66
    %88 = vmatpush.msra.mxu0 %v65
    %89 = vmatpush.msra.mxu0 %v64
    %90 = vmatpush.msra.mxu0 %v63
    %91 = vmatmul.f32.gmra.mxu0 %v73
    %v92 = vpop.f32.mrf.mxu0
    %v93 = vadd.f32 %v69, %v92
    %94 = vdwg.mxu0
    %v95 = vmax.f32 %v93, 0.0
    %v96 = vld [vmem:[#allocation6] sm:$0xff]
    %v97 = vld [vmem:[#allocation6 + $0x8] sm:$0xff]
    %v98 = vld [vmem:[#allocation6 + $0x10] sm:$0xff]
    %v99 = vld [vmem:[#allocation6 + $0x18] sm:$0xff]
    %v100 = vld [vmem:[#allocation6 + $0x20] sm:$0xff]
    %v101 = vld [vmem:[#allocation6 + $0x28] sm:$0xff]
    %v102 = vld [vmem:[#allocation6 + $0x30] sm:$0xff]
    %v103 = vld [vmem:[#allocation6 + $0x38] sm:$0xff]
    %v104 = vld [vmem:[#allocation6 + $0x40] sm:$0xff]
    %v105 = vld [vmem:[#allocation6 + $0x48] sm:$0xff]
    %v106 = vld [vmem:[#allocation6 + $0x50] sm:$0xff]
    %v107 = vld [vmem:[#allocation6 + $0x58] sm:$0xff]
    %v108 = vld [vmem:[#allocation6 + $0x60] sm:$0xff]
    %v109 = vld [vmem:[#allocation6 + $0x68] sm:$0xff]
    %v110 = vld [vmem:[#allocation6 + $0x70] sm:$0xff]
    %v111 = vld [vmem:[#allocation6 + $0x78] sm:$0xff]
    %112 = vmatpush.msra.mxu0 %v111
    %113 = vmatpush.msra.mxu0 %v110
    %114 = vmatpush.msra.mxu0 %v109
    %115 = vmatpush.msra.mxu0 %v108
    %116 = vmatpush.msra.mxu0 %v107
    %117 = vmatpush.msra.mxu0 %v106
    %118 = vmatpush.msra.mxu0 %v105
    %119 = vmatpush.msra.mxu0 %v104
    %120 = vmatpush.msra.mxu0 %v103
    %121 = vmatpush.msra.mxu0 %v102
    %122 = vmatpush.msra.mxu0 %v101
    %123 = vmatpush.msra.mxu0 %v100
    %124 = vmatpush.msra.mxu0 %v99
    %125 = vmatpush.msra.mxu0 %v98
    %126 = vmatpush.msra.mxu0 %v97
    %127 = vmatpush.msra.mxu0 %v96
    %128 = vmatmul.f32.gmra.mxu0 %v95
    %v129 = vpop.f32.mrf.mxu0
    %v130 = vadd.f32 0.0, %v129
    %131 = vdwg.mxu0
    %vm132 = vcmask 64512
    %133 = vst.msk [vmem:[%s4] sm:$0xff] %vm132, %v130
    // Predicated region
    $region30: #{_lambda_.1} parent=1 // pred_check
      _
    $region31: #{_lambda_.1} parent=1 // pred_check_branch
      %135 = sbr.rel (0) target = $region33
    $region32: #{_lambda_.1} parent=1 // pred_region
      _
    $region33: #{_lambda_.1} parent=1 // pred_fallthru
      _
    // Predicated region
    $region34: #{_lambda_.1} parent=1 // pred_check
      _
    $region35: #{_lambda_.1} parent=1 // pred_check_branch
      %137 = sbr.rel (0) target = $region37
    $region36: #{_lambda_.1} parent=1 // pred_region
      _
    $region37: #{_lambda_.1} parent=1 // pred_fallthru
      _
    %138 = vsyncpa [#allocation3], 1
    %139 = vsyncpa [#allocation5], 1

</llo_original>
